<compile_context>
chip_gen: v7x
topology: tpu7x:2x2x1
jax: 0.10.0
libtpu: 0.0.40
codegen_flags: <defaults>
</compile_context>

<pallas_src>
import jax
import jax.numpy as jnp
from jax.experimental import pallas as pl
from jax.experimental.pallas import tpu as pltpu


def _round_up(x: int, m: int) -> int:
    return ((x + m - 1) // m) * m


def _cdiv(a: int, b: int) -> int:
    return -(-a // b)


def qnetwork_kernel(x_ref, w1_ref, b1_ref, w2_ref, b2_ref, o_ref):
    # x_ref : (BR, C) f32 VMEM  -- batch packed dense on sublanes AND lanes
    # w1_ref: (2,)  f32 SMEM    -- W1[j, 0]
    # b1_ref: (2,)  f32 SMEM
    # w2_ref: (4,)  f32 SMEM    -- row-major W2: [W2[0,0], W2[0,1], W2[1,0], W2[1,1]]
    # b2_ref: (2,)  f32 SMEM
    # o_ref : (2, BR, C) f32 VMEM -- feature-major output planes
    x = x_ref[...]                                               # (BR, C)

    # Layer 1: Linear(1, 2) + ReLU == K=1 outer product -> VPU broadcast FMAs.
    h0 = jnp.maximum(x * w1_ref[0] + b1_ref[0], 0.0)             # (BR, C)
    h1 = jnp.maximum(x * w1_ref[1] + b1_ref[1], 0.0)             # (BR, C)

    # Layer 2: Linear(2, 2) == K=2 broadcast FMAs; full-plane unmasked stores.
    o_ref[0] = h0 * w2_ref[0] + h1 * w2_ref[1] + b2_ref[0]
    o_ref[1] = h0 * w2_ref[2] + h1 * w2_ref[3] + b2_ref[1]


def qnetwork_forward_packed(x, w1, b1, w2, b2, *, lane_width: int = 1024,
                            block_rows: int = 512):
    """QNetwork forward on a batch packed into dense (R, C) tiles.

    x: (N, 1) f32 (PyTorch layout). Returns the feature-major packed output of
    shape (2, R, C) f32; element [f, r, c] is output feature f of batch element
    r*C + c (elements with flat index >= N are padding). This is the
    traffic-optimal layout for downstream consumers (no transpose pass).
    """
    n = x.shape[0]
    x_flat = x.reshape(-1).astype(jnp.float32)

    # Lane width: multiple of 128, no wider than needed for tiny batches.
    c = min(lane_width, _round_up(max(n, 1), 128))
    r = _cdiv(n, c)
    n_pad = r * c
    if n_pad != n:
        # Only the ragged tail (< C elements) is logically padded; batch sizes
        # that are a multiple of C skip this (and its HBM copy) entirely.
        # TODO(synk): for huge non-multiple batches this pad is still one extra
        # read+write of x; a split main/tail dispatch would remove it.
        x_flat = jnp.pad(x_flat, (0, n_pad - n))
    x2d = x_flat.reshape(r, c)                                   # (R, C)

    # Row-block size: ~2 MiB f32 input (=> 4 MiB output) per grid step.
    br = min(r, block_rows)
    if br < r:
        br = max(8, (br // 8) * 8)        # (8,128) block-shape constraint
    grid = (_cdiv(r, br),)

    # The 10 network parameters as tiny f32 scalar tables in SMEM.
    w1_flat = w1.reshape(-1).astype(jnp.float32)                 # (2,)
    b1_flat = b1.reshape(-1).astype(jnp.float32)                 # (2,)
    w2_flat = w2.reshape(-1).astype(jnp.float32)                 # (4,) row-major
    b2_flat = b2.reshape(-1).astype(jnp.float32)                 # (2,)
    smem_spec = pl.BlockSpec(memory_space=pltpu.MemorySpace.SMEM)

    return pl.pallas_call(
        qnetwork_kernel,
        out_shape=jax.ShapeDtypeStruct((2, r, c), jnp.float32),
        grid=grid,
        in_specs=[
            pl.BlockSpec((br, c), lambda i: (i, 0)),             # x, pipelined
            smem_spec,                                           # w1
            smem_spec,                                           # b1
            smem_spec,                                           # w2
            smem_spec,                                           # b2
        ],
        out_specs=pl.BlockSpec((2, br, c), lambda i: (0, i, 0)),
        compiler_params=pltpu.CompilerParams(
            dimension_semantics=("parallel",),                   # megacore on v7x
        ),
    )(x2d, w1_flat, b1_flat, w2_flat, b2_flat)


def qnetwork_forward(x, w1, b1, w2, b2, **kwargs):
    """PyTorch-layout convenience wrapper: x (N, 1) -> (N, 2).

    NOTE: the final slice + transpose is pure layout plumbing for parity with
    the nn.Module; latency-critical consumers should use
    qnetwork_forward_packed() and keep the feature-major layout.
    """
    n = x.shape[0]
    packed = qnetwork_forward_packed(x, w1, b1, w2, b2, **kwargs)  # (2, R, C)
    return packed.reshape(2, -1)[:, :n].T                          # (N, 2)


def init_params(key):
    # PyTorch-layout shapes:
    #   fc.0: Linear(1, 2) -> w1 (2, 1), b1 (2,)
    #   fc.2: Linear(2, 2) -> w2 (2, 2), b2 (2,)
    k1, k2, k3, k4 = jax.random.split(key, 4)
    w1 = jax.random.normal(k1, (2, 1), dtype=jnp.float32)
    b1 = jax.random.normal(k2, (2,), dtype=jnp.float32)
    w2 = jax.random.normal(k3, (2, 2), dtype=jnp.float32)
    b2 = jax.random.normal(k4, (2,), dtype=jnp.float32)
    return w1, b1, w2, b2


def reference_forward(x, w1, b1, w2, b2):
    h = jnp.maximum(x @ w1.T + b1, 0.0)
    return h @ w2.T + b2


if __name__ == "__main__":
    key = jax.random.PRNGKey(0)
    k_x, k_x2, k_x3, k_p = jax.random.split(key, 4)
    w1, b1, w2, b2 = init_params(k_p)

    # 1) Small RL-style batch: single full-extent block, grid=(1,).
    batch = 8
    x = jax.random.normal(k_x, (batch, 1), dtype=jnp.float32)
    out = jax.block_until_ready(qnetwork_forward(x, w1, b1, w2, b2))
    ref = reference_forward(x, w1, b1, w2, b2)
    assert out.shape == (batch, 2)
    assert jnp.allclose(out, ref, atol=1e-5, rtol=1e-5)

    # 2) Non-multiple batch: exercises the tail-padding path.
    batch2 = 1200
    x2 = jax.random.normal(k_x2, (batch2, 1), dtype=jnp.float32)
    out2 = jax.block_until_ready(qnetwork_forward(x2, w1, b1, w2, b2))
    ref2 = reference_forward(x2, w1, b1, w2, b2)
    assert out2.shape == (batch2, 2)
    assert jnp.allclose(out2, ref2, atol=1e-5, rtol=1e-5)

    # 3) Multi-block grid with a ragged last block (small tiles for coverage).
    batch3 = 5000
    x3 = jax.random.normal(k_x3, (batch3, 1), dtype=jnp.float32)
    out3 = jax.block_until_ready(
        qnetwork_forward(x3, w1, b1, w2, b2, lane_width=128, block_rows=16))
    ref3 = reference_forward(x3, w1, b1, w2, b2)
    assert out3.shape == (batch3, 2)
    assert jnp.allclose(out3, ref3, atol=1e-5, rtol=1e-5)

    print("KERNEL_OK")
</pallas_src>

<mosaic_0001>
module attributes {stable_mosaic.version = 11 : i64} {
  func.func @qnetwork_kernel(%arg0: i32, %arg1: memref<1x128xf32, #tpu.memory_space<vmem>>, %arg2: memref<2xf32, #tpu.memory_space<smem>>, %arg3: memref<2xf32, #tpu.memory_space<smem>>, %arg4: memref<4xf32, #tpu.memory_space<smem>>, %arg5: memref<2xf32, #tpu.memory_space<smem>>, %arg6: memref<2x1x128xf32, #tpu.memory_space<vmem>>) attributes {dimension_semantics = [#tpu.dimension_semantics<parallel>], iteration_bounds = array<i64: 1>, scalar_prefetch = 0 : i64, scratch_operands = 0 : i64, tpu.core_type = #tpu.core_type<tc>, window_params = [{transform_indices = @transform_0, window_bounds = array<i64: 1, 128>}, {transform_indices = @transform_1, window_bounds = array<i64: 2>}, {transform_indices = @transform_2, window_bounds = array<i64: 2>}, {transform_indices = @transform_3, window_bounds = array<i64: 4>}, {transform_indices = @transform_4, window_bounds = array<i64: 2>}, {transform_indices = @transform_5, window_bounds = array<i64: 2, 1, 128>}]} {
    %c0 = arith.constant 0 : index
    %c0_0 = arith.constant 0 : index
    %0 = vector.load %arg1[%c0, %c0_0] : memref<1x128xf32, #tpu.memory_space<vmem>>, vector<1x128xf32>
    %c0_1 = arith.constant 0 : index
    %1 = memref.load %arg2[%c0_1] : memref<2xf32, #tpu.memory_space<smem>>
    %2 = vector.broadcast %1 : f32 to vector<1x128xf32>
    %3 = arith.mulf %0, %2 : vector<1x128xf32>
    %c0_2 = arith.constant 0 : index
    %4 = memref.load %arg3[%c0_2] : memref<2xf32, #tpu.memory_space<smem>>
    %5 = vector.broadcast %4 : f32 to vector<1x128xf32>
    %6 = arith.addf %3, %5 : vector<1x128xf32>
    %cst = arith.constant 0.000000e+00 : f32
    %7 = vector.broadcast %cst : f32 to vector<1x128xf32>
    %8 = arith.maximumf %6, %7 : vector<1x128xf32>
    %c1 = arith.constant 1 : index
    %9 = memref.load %arg2[%c1] : memref<2xf32, #tpu.memory_space<smem>>
    %10 = vector.broadcast %9 : f32 to vector<1x128xf32>
    %11 = arith.mulf %0, %10 : vector<1x128xf32>
    %c1_3 = arith.constant 1 : index
    %12 = memref.load %arg3[%c1_3] : memref<2xf32, #tpu.memory_space<smem>>
    %13 = vector.broadcast %12 : f32 to vector<1x128xf32>
    %14 = arith.addf %11, %13 : vector<1x128xf32>
    %cst_4 = arith.constant 0.000000e+00 : f32
    %15 = vector.broadcast %cst_4 : f32 to vector<1x128xf32>
    %16 = arith.maximumf %14, %15 : vector<1x128xf32>
    %c0_5 = arith.constant 0 : index
    %17 = memref.load %arg4[%c0_5] : memref<4xf32, #tpu.memory_space<smem>>
    %18 = vector.broadcast %17 : f32 to vector<1x128xf32>
    %19 = arith.mulf %8, %18 : vector<1x128xf32>
    %c1_6 = arith.constant 1 : index
    %20 = memref.load %arg4[%c1_6] : memref<4xf32, #tpu.memory_space<smem>>
    %21 = vector.broadcast %20 : f32 to vector<1x128xf32>
    %22 = arith.mulf %16, %21 : vector<1x128xf32>
    %23 = arith.addf %19, %22 : vector<1x128xf32>
    %c0_7 = arith.constant 0 : index
    %24 = memref.load %arg5[%c0_7] : memref<2xf32, #tpu.memory_space<smem>>
    %25 = vector.broadcast %24 : f32 to vector<1x128xf32>
    %26 = arith.addf %23, %25 : vector<1x128xf32>
    %c0_8 = arith.constant 0 : index
    %c0_9 = arith.constant 0 : index
    %c0_10 = arith.constant 0 : index
    %27 = vector.load %arg6[%c0_8, %c0_9, %c0_10] : memref<2x1x128xf32, #tpu.memory_space<vmem>>, vector<1x1x128xf32>
    %28 = vector.shape_cast %27 : vector<1x1x128xf32> to vector<1x128xf32>
    %29 = vector.shape_cast %26 : vector<1x128xf32> to vector<1x1x128xf32>
    tpu.vector_store %arg6[%c0_8, %c0_9, %c0_10], %29 {strides = array<i32>} : memref<2x1x128xf32, #tpu.memory_space<vmem>>, vector<1x1x128xf32>,
    %c2 = arith.constant 2 : index
    %30 = memref.load %arg4[%c2] : memref<4xf32, #tpu.memory_space<smem>>
    %31 = vector.broadcast %30 : f32 to vector<1x128xf32>
    %32 = arith.mulf %8, %31 : vector<1x128xf32>
    %c3 = arith.constant 3 : index
    %33 = memref.load %arg4[%c3] : memref<4xf32, #tpu.memory_space<smem>>
    %34 = vector.broadcast %33 : f32 to vector<1x128xf32>
    %35 = arith.mulf %16, %34 : vector<1x128xf32>
    %36 = arith.addf %32, %35 : vector<1x128xf32>
    %c1_11 = arith.constant 1 : index
    %37 = memref.load %arg5[%c1_11] : memref<2xf32, #tpu.memory_space<smem>>
    %38 = vector.broadcast %37 : f32 to vector<1x128xf32>
    %39 = arith.addf %36, %38 : vector<1x128xf32>
    %c1_12 = arith.constant 1 : index
    %c0_13 = arith.constant 0 : index
    %c0_14 = arith.constant 0 : index
    %40 = vector.load %arg6[%c1_12, %c0_13, %c0_14] : memref<2x1x128xf32, #tpu.memory_space<vmem>>, vector<1x1x128xf32>
    %41 = vector.shape_cast %40 : vector<1x1x128xf32> to vector<1x128xf32>
    %42 = vector.shape_cast %39 : vector<1x128xf32> to vector<1x1x128xf32>
    tpu.vector_store %arg6[%c1_12, %c0_13, %c0_14], %42 {strides = array<i32>} : memref<2x1x128xf32, #tpu.memory_space<vmem>>, vector<1x1x128xf32>,
    return
  }
  func.func @transform_0(%arg0: i32) -> (i32, i32) {
    %c0_i32 = arith.constant 0 : i32
    %c0_i32_0 = arith.constant 0 : i32
    return %arg0, %c0_i32 : i32, i32
  }
  func.func @transform_1(%arg0: i32) -> i32 {
    %c0_i32 = arith.constant 0 : i32
    %c0_i32_0 = arith.constant 0 : i32
    return %c0_i32 : i32
  }
  func.func @transform_2(%arg0: i32) -> i32 {
    %c0_i32 = arith.constant 0 : i32
    %c0_i32_0 = arith.constant 0 : i32
    return %c0_i32 : i32
  }
  func.func @transform_3(%arg0: i32) -> i32 {
    %c0_i32 = arith.constant 0 : i32
    %c0_i32_0 = arith.constant 0 : i32
    return %c0_i32 : i32
  }
  func.func @transform_4(%arg0: i32) -> i32 {
    %c0_i32 = arith.constant 0 : i32
    %c0_i32_0 = arith.constant 0 : i32
    return %c0_i32 : i32
  }
  func.func @transform_5(%arg0: i32) -> (i32, i32, i32) {
    %c0_i32 = arith.constant 0 : i32
    %c0_i32_0 = arith.constant 0 : i32
    %c0_i32_1 = arith.constant 0 : i32
    return %c0_i32, %arg0, %c0_i32_0 : i32, i32, i32
  }
}

</mosaic_0001>

<llo_original>
// kernel: tpu_custom_call.1
$region0: #{tpu_custom_call.1}
  #allocation0 [shape = 'u32[]', space=smem, size = 0x4, offset = 0x4, fixed_abs, tag = 'smem constant byte address 0x4 - core index']
  #allocation1 [shape = 'u32[144,128]{1,0:T(1,128)}', space=vmem, size = 0x12000, scoped, tag = 'internal scratch']
  %s0 = inlined_call_operand.hbm [shape: f32[1,128], index: 0, kind: input, shape index: {}]
  %s1 = inlined_call_operand.vmem [shape: f32[2], index: 1, kind: input, shape index: {}]
  %s2 = inlined_call_operand.vmem [shape: f32[2], index: 2, kind: input, shape index: {}]
  %s3 = inlined_call_operand.vmem [shape: f32[4], index: 3, kind: input, shape index: {}]
  %s4 = inlined_call_operand.vmem [shape: f32[2], index: 4, kind: input, shape index: {}]
  %s5 = inlined_call_operand.hbm [shape: f32[2,1,128], index: 5, kind: output, shape index: {}]
  %s6 = sld [smem:[#allocation0]]
  $region50: #{tpu_custom_call.1} parent=0
    _
  %s8 = ssub.s32 1, %s6
  %s9 = scalar_select 0, %s8, %s6
  $region1: #{tpu_custom_call.1} parent=0
    #allocation2 [shape = 'u8[512]{0}', space=vmem, size = 0x400, scoped, tag = 'input window, operand 0, single buffered']
    #allocation3 [shape = 's32[1]{0}', space=sflag, size = 0x4, scoped, tag = 'scoped memory for tpu_custom_call.1']
    #allocation4 [shape = 's32[1]{0}', space=sflag, size = 0x4, scoped, tag = 'scoped memory for tpu_custom_call.1']
    #allocation5 [shape = 's32[1]{0}', space=sflag, size = 0x4, scoped, tag = 'scoped memory for tpu_custom_call.1']
    #allocation6 [shape = 'u8[512]{0}', space=smem, size = 0x200, scoped, tag = 'input window, operand 1, single buffered']
    #allocation7 [shape = 'u8[512]{0}', space=smem, size = 0x200, scoped, tag = 'input window, operand 2, single buffered']
    #allocation8 [shape = 's32[1]{0}', space=sflag, size = 0x4, scoped, tag = 'scoped memory for tpu_custom_call.1']
    #allocation9 [shape = 'u8[512]{0}', space=smem, size = 0x200, scoped, tag = 'input window, operand 3, single buffered']
    #allocation10 [shape = 'u8[512]{0}', space=smem, size = 0x200, scoped, tag = 'input window, operand 4, single buffered']
    #allocation11 [shape = 's32[1]{0}', space=sflag, size = 0x4, scoped, tag = 'scoped memory for tpu_custom_call.1']
    #allocation12 [shape = 'u8[1024]{0}', space=vmem, size = 0x400, scoped, tag = 'output window, operand 0, single buffered']
    %10 = vsyncpa [#allocation3], 0
    %11 = vsyncpa [#allocation5], 0
    %12 = vsyncpa [#allocation8], 0
    %13 = vsyncpa [#allocation11], 0
    %14 = vsyncpa [#allocation4], 0
    // Predicated region
    $region2: #{tpu_custom_call.1} parent=1 // pred_check
      _
    $region3: #{tpu_custom_call.1} parent=1 // pred_check_branch
      %16 = sbr.rel (0) target = $region5
    $region4: #{tpu_custom_call.1} parent=1 // pred_region
      %s18 = ssub.s32 16, 16
      %19 = vsyncadd [#allocation3], %s18
      %s21 = sshll.u32 [#allocation2], 4
      %s22 = int_to_ptr.vmem [resolvable:$true] %s21
      %24 = dma.hbm_to_vmem [thread:$0]  %s0, 16, %s22, [#allocation3]
    $region5: #{tpu_custom_call.1} parent=1 // pred_fallthru
      _
    // Predicated region
    $region6: #{tpu_custom_call.1} parent=1 // pred_check
      _
    $region7: #{tpu_custom_call.1} parent=1 // pred_check_branch
      %26 = sbr.rel (0) target = $region9
    $region8: #{tpu_custom_call.1} parent=1 // pred_region
      %s28 = ssub.s32 16, 16
      %29 = vsyncadd [#allocation5], %s28
      %s31 = sshll.u32 %s1, 4
      %s32 = int_to_ptr.vmem [resolvable:$true] %s31
      %34 = dma.vmem_to_smem %s32, 16, [#allocation6], [#allocation5]
    $region9: #{tpu_custom_call.1} parent=1 // pred_fallthru
      _
    // Predicated region
    $region10: #{tpu_custom_call.1} parent=1 // pred_check
      _
    $region11: #{tpu_custom_call.1} parent=1 // pred_check_branch
      %36 = sbr.rel (0) target = $region13
    $region12: #{tpu_custom_call.1} parent=1 // pred_region
      %s38 = ssub.s32 16, 16
      %39 = vsyncadd [#allocation8], %s38
      %s41 = sshll.u32 %s2, 4
      %s42 = int_to_ptr.vmem [resolvable:$true] %s41
      %44 = dma.vmem_to_smem %s42, 16, [#allocation7], [#allocation8]
    $region13: #{tpu_custom_call.1} parent=1 // pred_fallthru
      _
    // Predicated region
    $region14: #{tpu_custom_call.1} parent=1 // pred_check
      _
    $region15: #{tpu_custom_call.1} parent=1 // pred_check_branch
      %46 = sbr.rel (0) target = $region17
    $region16: #{tpu_custom_call.1} parent=1 // pred_region
      %s48 = ssub.s32 16, 16
      %49 = vsyncadd [#allocation8], %s48
      %s51 = sshll.u32 %s3, 4
      %s52 = int_to_ptr.vmem [resolvable:$true] %s51
      %54 = dma.vmem_to_smem %s52, 16, [#allocation9], [#allocation8]
    $region17: #{tpu_custom_call.1} parent=1 // pred_fallthru
      _
    // Predicated region
    $region18: #{tpu_custom_call.1} parent=1 // pred_check
      _
    $region19: #{tpu_custom_call.1} parent=1 // pred_check_branch
      %56 = sbr.rel (0) target = $region21
    $region20: #{tpu_custom_call.1} parent=1 // pred_region
      %s58 = ssub.s32 16, 16
      %59 = vsyncadd [#allocation11], %s58
      %s61 = sshll.u32 %s4, 4
      %s62 = int_to_ptr.vmem [resolvable:$true] %s61
      %64 = dma.vmem_to_smem %s62, 16, [#allocation10], [#allocation11]
    $region21: #{tpu_custom_call.1} parent=1 // pred_fallthru
      _
    // Predicated region
    $region22: #{tpu_custom_call.1} parent=1 // pred_check
      _
    $region23: #{tpu_custom_call.1} parent=1 // pred_check_branch
      %66 = sbr.rel (0) target = $region25
    $region24: #{tpu_custom_call.1} parent=1 // pred_region
      %67 = dma.done [#allocation3], 16
    $region25: #{tpu_custom_call.1} parent=1 // pred_fallthru
      _
    // Predicated region
    $region26: #{tpu_custom_call.1} parent=1 // pred_check
      _
    $region27: #{tpu_custom_call.1} parent=1 // pred_check_branch
      %69 = sbr.rel (0) target = $region29
    $region28: #{tpu_custom_call.1} parent=1 // pred_region
      %70 = dma.done [#allocation5], 16
    $region29: #{tpu_custom_call.1} parent=1 // pred_fallthru
      _
    // Predicated region
    $region30: #{tpu_custom_call.1} parent=1 // pred_check
      _
    $region31: #{tpu_custom_call.1} parent=1 // pred_check_branch
      %72 = sbr.rel (0) target = $region33
    $region32: #{tpu_custom_call.1} parent=1 // pred_region
      %73 = dma.done [#allocation8], 16
    $region33: #{tpu_custom_call.1} parent=1 // pred_fallthru
      _
    // Predicated region
    $region34: #{tpu_custom_call.1} parent=1 // pred_check
      _
    $region35: #{tpu_custom_call.1} parent=1 // pred_check_branch
      %75 = sbr.rel (0) target = $region37
    $region36: #{tpu_custom_call.1} parent=1 // pred_region
      %76 = dma.done [#allocation8], 16
    $region37: #{tpu_custom_call.1} parent=1 // pred_fallthru
      _
    // Predicated region
    $region38: #{tpu_custom_call.1} parent=1 // pred_check
      _
    $region39: #{tpu_custom_call.1} parent=1 // pred_check_branch
      %78 = sbr.rel (0) target = $region41
    $region40: #{tpu_custom_call.1} parent=1 // pred_region
      %79 = dma.done [#allocation11], 16
    $region41: #{tpu_custom_call.1} parent=1 // pred_fallthru
      _
    %80 = sfence
    %v81 = vld [vmem:[#allocation2] sm:$0x1]
    %s82 = sld [smem:[#allocation6]]
    %v83 = vstv %s82
    %v84 = vmul.f32 %v81, %v83
    %s85 = sld [smem:[#allocation7]]
    %v86 = vstv %s85
    %v87 = vadd.f32 %v84, %v86
    %v88 = vmax.f32 %v87, 0.0
    %s89 = sld [smem:[#allocation6 + $0x1]]
    %v90 = vstv %s89
    %v91 = vmul.f32 %v81, %v90
    %s92 = sld [smem:[#allocation7 + $0x1]]
    %v93 = vstv %s92
    %v94 = vadd.f32 %v91, %v93
    %v95 = vmax.f32 %v94, 0.0
    %s96 = sld [smem:[#allocation9]]
    %v97 = vstv %s96
    %v98 = vmul.f32 %v88, %v97
    %s99 = sld [smem:[#allocation9 + $0x1]]
    %v100 = vstv %s99
    %v101 = vmul.f32 %v95, %v100
    %v102 = vadd.f32 %v98, %v101
    %s103 = sld [smem:[#allocation10]]
    %v104 = vstv %s103
    %v105 = vadd.f32 %v102, %v104
    %106 = vst [vmem:[#allocation12] sm:$0x1] %v105
    %s107 = sld [smem:[#allocation9 + $0x2]]
    %v108 = vstv %s107
    %v109 = vmul.f32 %v88, %v108
    %s110 = sld [smem:[#allocation9 + $0x3]]
    %v111 = vstv %s110
    %v112 = vmul.f32 %v95, %v111
    %v113 = vadd.f32 %v109, %v112
    %s114 = sld [smem:[#allocation10 + $0x1]]
    %v115 = vstv %s114
    %v116 = vadd.f32 %v113, %v115
    %s117 = scalar_lea.vmem [#allocation12], 1
    %118 = vst [vmem:[%s117] sm:$0x1] %v116
    // Predicated region
    $region42: #{tpu_custom_call.1} parent=1 // pred_check
      _
    $region43: #{tpu_custom_call.1} parent=1 // pred_check_branch
      %120 = sbr.rel (0) target = $region45
    $region44: #{tpu_custom_call.1} parent=1 // pred_region
      %s122 = ssub.s32 32, 32
      %123 = vsyncadd [#allocation4], %s122
      %s124 = sshll.u32 [#allocation12], 4
      %s125 = int_to_ptr.vmem [resolvable:$true] %s124
      %130 = dma.vmem_to_hbm [thread:$0]  %s125, 32, %s5, [#allocation4], 16, 16, 1
    $region45: #{tpu_custom_call.1} parent=1 // pred_fallthru
      _
    // Predicated region
    $region46: #{tpu_custom_call.1} parent=1 // pred_check
      _
    $region47: #{tpu_custom_call.1} parent=1 // pred_check_branch
      %132 = sbr.rel (0) target = $region49
    $region48: #{tpu_custom_call.1} parent=1 // pred_region
      %133 = dma.done [#allocation4], 32
    $region49: #{tpu_custom_call.1} parent=1 // pred_fallthru
      _
    %134 = vsyncpa [#allocation3], 1
    %135 = vsyncpa [#allocation4], 1
    %136 = vsyncpa [#allocation5], 1
    %137 = vsyncpa [#allocation8], 1
    %138 = vsyncpa [#allocation11], 1

</llo_original>
